<compile_context>
chip_gen: v7x
topology: tpu7x:2x2x1
jax: 0.10.0
libtpu: 0.0.40
codegen_flags: <defaults>
</compile_context>

<pallas_src>
import numpy as np
import jax
import jax.numpy as jnp
from jax.experimental import pallas as pl
from jax.experimental.pallas import tpu as pltpu


# ---------------------------------------------------------------------------
# Deterministic synthetic vignette mask (stands in for
# transformations.get_vingette_mask).  Values are exactly 0.0 / 1.0.
# TODO(synk): verify radius/offset convention against transformations.get_vingette_mask.
# ---------------------------------------------------------------------------
def get_vingette_mask(size, shape_type="circ", offset=0):
    C, H, W = size
    ys = np.arange(H, dtype=np.float32) - (H - 1) / 2.0
    xs = np.arange(W, dtype=np.float32) - (W - 1) / 2.0
    yy, xx = np.meshgrid(ys, xs, indexing="ij")
    if shape_type == "circ":
        r = min(H, W) / 2.0 - offset
        mask2d = (np.sqrt(yy * yy + xx * xx) <= r).astype(np.float32)
    else:  # "rect"
        mask2d = (
            (np.abs(yy) <= (H / 2.0 - offset)) & (np.abs(xx) <= (W / 2.0 - offset))
        ).astype(np.float32)
    return np.broadcast_to(mask2d[None, :, :], (C, H, W)).copy()


# ---------------------------------------------------------------------------
# Kernel: elementwise multiply of a (TB, TL) tile by the (1, TL) mask tile.
# ---------------------------------------------------------------------------
def _vingette_kernel(v_ref, x_ref, o_ref):
    # v_ref: (1, TL)  mask tile (broadcast over the batch rows of the block)
    # x_ref: (TB, TL) input tile
    o_ref[...] = x_ref[...] * v_ref[...]


_TARGET_BLOCK_BYTES = 2 * 1024 * 1024   # ~2 MiB per x/out block
_MAX_LANE_TILE = 16384                  # lane-dense tile cap (multiple of 128)


def _choose_tiles(N, CHW, itemsize):
    """Pick (TB, TL) block dims that satisfy the (8,128)/full-dim rule."""
    # Lane tile (last dim): full extent if it fits the cap (always legal),
    # otherwise a large multiple of 128 (partial trailing block is masked).
    TL = CHW if CHW <= _MAX_LANE_TILE else _MAX_LANE_TILE

    # Batch tile (second-to-last dim): merge rows until ~2 MiB per block.
    # Must be a multiple of the sublane packing factor or the full extent.
    sub_mult = 8 * max(1, 4 // max(1, itemsize))   # 8 f32, 16 bf16, 32 int8
    rows_target = max(1, _TARGET_BLOCK_BYTES // (TL * itemsize))
    if rows_target >= N:
        TB = N                                     # full batch extent (legal)
    else:
        TB = max(sub_mult, (rows_target // sub_mult) * sub_mult)
        TB = min(TB, N)                            # == N (full) or mult of sub_mult
    return TB, TL


def vingette_forward(V, x):
    """V: (1, C, H, W) mask.  x: (N, C, H, W).  Returns V * x (in x.dtype)."""
    N, C, H, W = x.shape
    assert V.shape[-3:] == (C, H, W)
    CHW = C * H * W
    dtype = x.dtype
    itemsize = jnp.dtype(dtype).itemsize

    # Free, contiguous reshapes: make the flattened C*H*W axis the lane axis.
    x2 = x.reshape(N, CHW)
    v2 = V.reshape(1, CHW).astype(dtype)   # mask is exactly 0/1 -> lossless

    TB, TL = _choose_tiles(N, CHW, itemsize)
    # Grid: lane tiles outer, batch tiles inner (fastest) -> mask block index
    # is constant across the inner loop and its DMA is elided.
    grid = (pl.cdiv(CHW, TL), pl.cdiv(N, TB))

    out2 = pl.pallas_call(
        _vingette_kernel,
        out_shape=jax.ShapeDtypeStruct((N, CHW), dtype),
        grid=grid,
        in_specs=[
            pl.BlockSpec((1, TL), lambda l, b: (0, l)),    # mask: lane tile only
            pl.BlockSpec((TB, TL), lambda l, b: (b, l)),   # x
        ],
        out_specs=pl.BlockSpec((TB, TL), lambda l, b: (b, l)),
        compiler_params=pltpu.CompilerParams(
            dimension_semantics=("parallel", "parallel"),
        ),
        cost_estimate=pl.CostEstimate(
            flops=N * CHW,
            transcendentals=0,
            bytes_accessed=2 * N * CHW * itemsize + CHW * itemsize,
        ),
    )(v2, x2)

    return out2.reshape(N, C, H, W)


class VingetteModule:
    """JAX/Pallas equivalent of the PyTorch VingetteModule."""

    _PALLAS_MIN_BYTES = 1 << 20   # below ~1 MiB, fused XLA elementwise wins

    def __init__(self, size, shape, offset):
        V = get_vingette_mask(size, shape_type=shape, offset=offset)  # (C, H, W)
        self.V = jnp.asarray(V, dtype=jnp.float32)[None, ...]          # (1, C, H, W)

    def __call__(self, x, force_pallas=False):
        # Compute in x's dtype (mask is exactly 0/1, so this is bit-exact for
        # f32 and halves HBM traffic for bf16 inputs vs. upcasting to f32).
        if not force_pallas and x.size * jnp.dtype(x.dtype).itemsize < self._PALLAS_MIN_BYTES:
            return self.V.astype(x.dtype) * x     # tiny input: skip kernel launch overhead
        return vingette_forward(self.V, x)


if __name__ == "__main__":
    key = jax.random.PRNGKey(0)
    k1, k2 = jax.random.split(key)

    # Small shape consistent with the module: batch=2, channels=4, spatial=16.
    N, C, H, W = 2, 4, 16, 16
    x = jax.random.normal(k1, (N, C, H, W), dtype=jnp.float32)

    module = VingetteModule(size=(C, H, W), shape="circ", offset=2)

    # Run the Pallas kernel directly (the module's auto path would skip Pallas
    # at this tiny size per the perf guidance).
    out = jax.block_until_ready(vingette_forward(module.V, x))
    ref = module.V * x
    np.testing.assert_allclose(np.asarray(out), np.asarray(ref), rtol=1e-6, atol=1e-6)

    # Module auto-dispatch path (plain JAX at this size) must also match.
    out_auto = jax.block_until_ready(module(x))
    np.testing.assert_allclose(np.asarray(out_auto), np.asarray(ref), rtol=1e-6, atol=1e-6)

    # Exercise multi-tile grids: lane tiling with mask-block reuse across the
    # batch axis, and a flattened length that is not a multiple of 128
    # (partial trailing lane block).
    for (N2, C2, H2, W2) in [(2, 8, 64, 64), (2, 5, 63, 63)]:
        x2 = jax.random.normal(k2, (N2, C2, H2, W2), dtype=jnp.float32)
        m2 = VingetteModule(size=(C2, H2, W2), shape="circ", offset=3)
        o2 = jax.block_until_ready(vingette_forward(m2.V, x2))
        r2 = m2.V * x2
        np.testing.assert_allclose(np.asarray(o2), np.asarray(r2), rtol=1e-6, atol=1e-6)

    print("KERNEL_OK")
</pallas_src>

<mosaic_0001>
module attributes {stable_mosaic.version = 11 : i64} {
  func.func @_vingette_kernel(%arg0: i32, %arg1: i32, %arg2: memref<1x1024xf32, #tpu.memory_space<vmem>>, %arg3: memref<2x1024xf32, #tpu.memory_space<vmem>>, %arg4: memref<2x1024xf32, #tpu.memory_space<vmem>>) attributes {dimension_semantics = [#tpu.dimension_semantics<parallel>, #tpu.dimension_semantics<parallel>], iteration_bounds = array<i64: 1, 1>, scalar_prefetch = 0 : i64, scratch_operands = 0 : i64, tpu.core_type = #tpu.core_type<tc>, window_params = [{transform_indices = @transform_0, window_bounds = array<i64: 1, 1024>}, {transform_indices = @transform_1, window_bounds = array<i64: 2, 1024>}, {transform_indices = @transform_2, window_bounds = array<i64: 2, 1024>}]} {
    %c0 = arith.constant 0 : index
    %c0_0 = arith.constant 0 : index
    %0 = vector.load %arg3[%c0, %c0_0] : memref<2x1024xf32, #tpu.memory_space<vmem>>, vector<2x1024xf32>
    %c0_1 = arith.constant 0 : index
    %c0_2 = arith.constant 0 : index
    %1 = vector.load %arg2[%c0_1, %c0_2] : memref<1x1024xf32, #tpu.memory_space<vmem>>, vector<1x1024xf32>
    %2 = vector.broadcast %1 : vector<1x1024xf32> to vector<2x1024xf32>
    %3 = arith.mulf %0, %2 : vector<2x1024xf32>
    %c0_3 = arith.constant 0 : index
    %c0_4 = arith.constant 0 : index
    %4 = vector.load %arg4[%c0_3, %c0_4] : memref<2x1024xf32, #tpu.memory_space<vmem>>, vector<2x1024xf32>
    tpu.vector_store %arg4[%c0_3, %c0_4], %3 {strides = array<i32>} : memref<2x1024xf32, #tpu.memory_space<vmem>>, vector<2x1024xf32>,
    return
  }
  func.func @transform_0(%arg0: i32, %arg1: i32) -> (i32, i32) {
    %c0_i32 = arith.constant 0 : i32
    %c0_i32_0 = arith.constant 0 : i32
    return %c0_i32, %arg0 : i32, i32
  }
  func.func @transform_1(%arg0: i32, %arg1: i32) -> (i32, i32) {
    %c0_i32 = arith.constant 0 : i32
    return %arg1, %arg0 : i32, i32
  }
  func.func @transform_2(%arg0: i32, %arg1: i32) -> (i32, i32) {
    %c0_i32 = arith.constant 0 : i32
    return %arg1, %arg0 : i32, i32
  }
}

</mosaic_0001>

<llo_original>
// kernel: tpu_custom_call.1
$region0: #{tpu_custom_call.1}
  #allocation0 [shape = 'u32[]', space=smem, size = 0x4, offset = 0x4, fixed_abs, tag = 'smem constant byte address 0x4 - core index']
  #allocation1 [shape = 'u32[144,128]{1,0:T(1,128)}', space=vmem, size = 0x12000, scoped, tag = 'internal scratch']
  %s0 = inlined_call_operand.hbm [shape: f32[1,1024], index: 0, kind: input, shape index: {}]
  %s1 = inlined_call_operand.hbm [shape: f32[2,1024], index: 1, kind: input, shape index: {}]
  %s2 = inlined_call_operand.hbm [shape: f32[2,1024], index: 2, kind: output, shape index: {}]
  %s3 = sld [smem:[#allocation0]]
  $region26: #{tpu_custom_call.1} parent=0
    _
  %s5 = ssub.s32 1, %s3
  %s6 = scalar_select 0, %s5, %s3
  $region1: #{tpu_custom_call.1} parent=0
    #allocation2 [shape = 'u8[4096]{0}', space=vmem, size = 0x1000, scoped, tag = 'input window, operand 0, single buffered']
    #allocation3 [shape = 's32[1]{0}', space=sflag, size = 0x4, scoped, tag = 'scoped memory for tpu_custom_call.1']
    #allocation4 [shape = 's32[1]{0}', space=sflag, size = 0x4, scoped, tag = 'scoped memory for tpu_custom_call.1']
    #allocation5 [shape = 'u8[8192]{0}', space=vmem, size = 0x2000, scoped, tag = 'input window, operand 1, single buffered']
    #allocation6 [shape = 's32[1]{0}', space=sflag, size = 0x4, scoped, tag = 'scoped memory for tpu_custom_call.1']
    #allocation7 [shape = 'u8[8192]{0}', space=vmem, size = 0x2000, scoped, tag = 'output window, operand 0, single buffered']
    %7 = vsyncpa [#allocation3], 0
    %8 = vsyncpa [#allocation6], 0
    %9 = vsyncpa [#allocation4], 0
    // Predicated region
    $region2: #{tpu_custom_call.1} parent=1 // pred_check
      _
    $region3: #{tpu_custom_call.1} parent=1 // pred_check_branch
      %11 = sbr.rel (0) target = $region5
    $region4: #{tpu_custom_call.1} parent=1 // pred_region
      %s13 = ssub.s32 128, 128
      %14 = vsyncadd [#allocation3], %s13
      %s16 = sshll.u32 [#allocation2], 4
      %s17 = int_to_ptr.vmem [resolvable:$true] %s16
      %19 = dma.hbm_to_vmem [thread:$0]  %s0, 128, %s17, [#allocation3]
    $region5: #{tpu_custom_call.1} parent=1 // pred_fallthru
      _
    // Predicated region
    $region6: #{tpu_custom_call.1} parent=1 // pred_check
      _
    $region7: #{tpu_custom_call.1} parent=1 // pred_check_branch
      %21 = sbr.rel (0) target = $region9
    $region8: #{tpu_custom_call.1} parent=1 // pred_region
      %s23 = ssub.s32 256, 256
      %24 = vsyncadd [#allocation6], %s23
      %s26 = sshll.u32 [#allocation5], 4
      %s27 = int_to_ptr.vmem [resolvable:$true] %s26
      %29 = dma.hbm_to_vmem [thread:$0]  %s1, 256, %s27, [#allocation6]
    $region9: #{tpu_custom_call.1} parent=1 // pred_fallthru
      _
    // Predicated region
    $region10: #{tpu_custom_call.1} parent=1 // pred_check
      _
    $region11: #{tpu_custom_call.1} parent=1 // pred_check_branch
      %31 = sbr.rel (0) target = $region13
    $region12: #{tpu_custom_call.1} parent=1 // pred_region
      %32 = dma.done [#allocation3], 128
    $region13: #{tpu_custom_call.1} parent=1 // pred_fallthru
      _
    // Predicated region
    $region14: #{tpu_custom_call.1} parent=1 // pred_check
      _
    $region15: #{tpu_custom_call.1} parent=1 // pred_check_branch
      %34 = sbr.rel (0) target = $region17
    $region16: #{tpu_custom_call.1} parent=1 // pred_region
      %35 = dma.done [#allocation6], 256
    $region17: #{tpu_custom_call.1} parent=1 // pred_fallthru
      _
    %v36 = vld [vmem:[#allocation5] sm:$0xff]
    %v37 = vld [vmem:[#allocation5 + $0x8] sm:$0xff]
    %v38 = vld [vmem:[#allocation2] sm:$0xff]
    %v40 = vlaneseq
    %v41 = vshrl.u32 %v40, 7
    %v42 = vsub.s32 0, %v41
    %v43 = vrot.slane %v38, %v42
    %v44 = vlaneseq
    %v45 = vshrl.u32 %v44, 7
    %v46 = vsub.s32 1, %v45
    %v47 = vrot.slane %v38, %v46
    %v48 = vlaneseq
    %v49 = vshrl.u32 %v48, 7
    %v50 = vsub.s32 2, %v49
    %v51 = vrot.slane %v38, %v50
    %v52 = vlaneseq
    %v53 = vshrl.u32 %v52, 7
    %v54 = vsub.s32 3, %v53
    %v55 = vrot.slane %v38, %v54
    %v56 = vlaneseq
    %v57 = vshrl.u32 %v56, 7
    %v58 = vsub.s32 4, %v57
    %v59 = vrot.slane %v38, %v58
    %v60 = vlaneseq
    %v61 = vshrl.u32 %v60, 7
    %v62 = vsub.s32 5, %v61
    %v63 = vrot.slane %v38, %v62
    %v64 = vlaneseq
    %v65 = vshrl.u32 %v64, 7
    %v66 = vsub.s32 6, %v65
    %v67 = vrot.slane %v38, %v66
    %v68 = vlaneseq
    %v69 = vshrl.u32 %v68, 7
    %v70 = vsub.s32 7, %v69
    %v71 = vrot.slane %v38, %v70
    %v72 = vcombine.low %v43, %v47
    %v73 = vcombine.low %v51, %v55
    %v75 = vunpack.c.l.s4 1983009808
    %v76 = vunpack.c.0.s8 %v75
    %v77 = vlaneseq
    %v78 = vshrl.u32 %v77, 7
    %v79 = vsub.s32 %v76, %v78
    %v80 = vrot.slane %v72, %v79
    %v82 = vunpack.c.l.s4 1983009808
    %v83 = vunpack.c.0.s8 %v82
    %v84 = vlaneseq
    %v85 = vshrl.u32 %v84, 7
    %v86 = vsub.s32 %v83, %v85
    %v87 = vrot.slane %v73, %v86
    %v88 = vcombine.low %v80, %v87
    %v89 = vcombine.low %v59, %v63
    %v90 = vcombine.low %v67, %v71
    %v92 = vunpack.c.l.s4 1983009808
    %v93 = vunpack.c.0.s8 %v92
    %v94 = vlaneseq
    %v95 = vshrl.u32 %v94, 7
    %v96 = vsub.s32 %v93, %v95
    %v97 = vrot.slane %v89, %v96
    %v99 = vunpack.c.l.s4 1983009808
    %v100 = vunpack.c.0.s8 %v99
    %v101 = vlaneseq
    %v102 = vshrl.u32 %v101, 7
    %v103 = vsub.s32 %v100, %v102
    %v104 = vrot.slane %v90, %v103
    %v105 = vcombine.low %v97, %v104
    %v108 = vmul.f32 %v36, %v88
    %v109 = vmul.f32 %v37, %v105
    %110 = vst [vmem:[#allocation7] sm:$0xff] %v108
    %111 = vst [vmem:[#allocation7 + $0x8] sm:$0xff] %v109
    // Predicated region
    $region18: #{tpu_custom_call.1} parent=1 // pred_check
      _
    $region19: #{tpu_custom_call.1} parent=1 // pred_check_branch
      %113 = sbr.rel (0) target = $region21
    $region20: #{tpu_custom_call.1} parent=1 // pred_region
      %s115 = ssub.s32 256, 256
      %116 = vsyncadd [#allocation4], %s115
      %s118 = sshll.u32 [#allocation7], 4
      %s119 = int_to_ptr.vmem [resolvable:$true] %s118
      %121 = dma.vmem_to_hbm [thread:$0]  %s119, 256, %s2, [#allocation4]
    $region21: #{tpu_custom_call.1} parent=1 // pred_fallthru
      _
    // Predicated region
    $region22: #{tpu_custom_call.1} parent=1 // pred_check
      _
    $region23: #{tpu_custom_call.1} parent=1 // pred_check_branch
      %123 = sbr.rel (0) target = $region25
    $region24: #{tpu_custom_call.1} parent=1 // pred_region
      %124 = dma.done [#allocation4], 256
    $region25: #{tpu_custom_call.1} parent=1 // pred_fallthru
      _
    %125 = vsyncpa [#allocation3], 1
    %126 = vsyncpa [#allocation6], 1
    %127 = vsyncpa [#allocation4], 1

</llo_original>
